<compile_context>
chip_gen: v6e
topology: v6e:2x2x1
jax: 0.10.0
libtpu: 0.0.40
codegen_flags: <defaults>
</compile_context>

<pallas_src>
import math

import jax
import jax.numpy as jnp
from jax.experimental import pallas as pl
from jax.experimental.pallas import tpu as pltpu

LANES = 128
SUBLANES = 8
TARGET_BLOCK_BYTES = 2 * 1024 * 1024   # per input, per grid step
VMEM_LIMIT_BYTES = 48 * 1024 * 1024    # <= 48 MiB: safe on v7x (64 MiB VMEM)


def _make_wl1_kernel(num_blocks, block_rows, valid_last, weighted):
    """Reduction kernel; all shape parameters are static Python ints."""
    last = num_blocks - 1
    last_partial = valid_last != block_rows

    def kernel(*refs):
        if weighted:
            x_ref, t_ref, w_ref, out_ref = refs
        else:
            x_ref, t_ref, out_ref = refs

        i = pl.program_id(0)

        @pl.when(i == 0)
        def _():
            out_ref[...] = jnp.zeros_like(out_ref)

        # Native-dtype DMA; upcast to f32 in VMEM for the accumulation.
        vals = jnp.abs(x_ref[...].astype(jnp.float32)
                       - t_ref[...].astype(jnp.float32))
        if weighted:
            vals = w_ref[...].astype(jnp.float32) * vals

        def accumulate(v):
            # Sublane-preserving fold into the resident (8, 128) accumulator;
            # the cross-sublane/lane collapse is deferred to the epilogue.
            out_ref[...] += v.reshape(-1, SUBLANES, LANES).sum(axis=0)

        if last_partial:
            # Mask only the single partial block (rows past `valid_last` are
            # Pallas out-of-bounds padding -> unspecified data).
            @pl.when(i != last)
            def _():
                accumulate(vals)

            @pl.when(i == last)
            def _():
                row_in_block = jax.lax.broadcasted_iota(
                    jnp.int32, (block_rows, LANES), 0)
                accumulate(jnp.where(row_in_block < valid_last, vals, 0.0))
        else:
            accumulate(vals)

    return kernel


def _tail_sum_f32(input, target, weight, start):
    """Plain-JAX sum over the trailing (< 128-element or tiny) remainder."""
    xt = input.reshape(-1)[start:].astype(jnp.float32)
    tt = target.reshape(-1)[start:].astype(jnp.float32)
    d = jnp.abs(xt - tt)
    if weight is not None:
        d = weight.reshape(-1)[start:].astype(jnp.float32) * d
    return jnp.sum(d)


def weighted_l1(input, target, weight=None, *, block_bytes=TARGET_BLOCK_BYTES):
    """sum(weight * |input - target|) / (N * prod(dims[2:])) — WeightedL1.forward."""
    assert input.shape == target.shape
    if weight is not None:
        assert weight.shape == input.shape

    # Static norm term (shapes are static): batch * prod(spatial dims).
    norm_term = float(input.shape[0]) * float(math.prod(input.shape[2:]))

    total = math.prod(input.shape)
    main_len = (total // LANES) * LANES
    rows = main_len // LANES
    if rows < SUBLANES:
        # Too small to tile profitably/legally; handle entirely in the epilogue.
        main_len = 0
        rows = 0
    rem = total - main_len

    operands_full = [input, target] + ([weight] if weight is not None else [])

    kernel_sum = jnp.float32(0.0)
    if rows > 0:
        itemsize = max(jnp.dtype(a.dtype).itemsize for a in operands_full)
        block_rows = (block_bytes // (LANES * itemsize)) // SUBLANES * SUBLANES
        block_rows = max(SUBLANES, min(block_rows, (rows // SUBLANES) * SUBLANES))
        num_blocks = -(-rows // block_rows)                       # cdiv
        valid_last = rows - (num_blocks - 1) * block_rows         # in (0, block_rows]

        def lane_major(a):
            flat = a.reshape(-1)                   # free for contiguous inputs
            if rem:
                flat = flat[:main_len]             # tail handled in the epilogue
            return flat.reshape(rows, LANES)

        operands = [lane_major(a) for a in operands_full]

        kernel = _make_wl1_kernel(num_blocks, block_rows, valid_last,
                                  weighted=weight is not None)

        in_spec = pl.BlockSpec((block_rows, LANES), lambda i: (i, 0))
        out_spec = pl.BlockSpec((SUBLANES, LANES), lambda i: (0, 0))

        partials = pl.pallas_call(
            kernel,
            out_shape=jax.ShapeDtypeStruct((SUBLANES, LANES), jnp.float32),
            grid=(num_blocks,),
            in_specs=[in_spec] * len(operands),
            out_specs=out_spec,
            compiler_params=pltpu.CompilerParams(
                dimension_semantics=("arbitrary",),
                vmem_limit_bytes=VMEM_LIMIT_BYTES,
            ),
        )(*operands)

        # Tiny epilogue: collapse the (8, 128) partial sums.
        kernel_sum = jnp.sum(partials)

    if rem:
        kernel_sum = kernel_sum + _tail_sum_f32(input, target, weight, main_len)

    return kernel_sum / norm_term


def _reference(x, t, w):
    d = jnp.abs(x.astype(jnp.float32) - t.astype(jnp.float32))
    if w is not None:
        d = w.astype(jnp.float32) * d
    norm = float(x.shape[0]) * float(math.prod(x.shape[2:]))
    return jnp.sum(d) / norm


if __name__ == "__main__":
    key = jax.random.PRNGKey(0)
    ks = jax.random.split(key, 9)

    # Primary small NCHW case: batch=2, channels=4, spatial 16x16.
    x = jax.random.normal(ks[0], (2, 4, 16, 16), jnp.float32)
    t = jax.random.normal(ks[1], (2, 4, 16, 16), jnp.float32)
    w = jax.random.uniform(ks[2], (2, 4, 16, 16), jnp.float32)

    loss_w = jax.block_until_ready(weighted_l1(x, t, w))
    loss_nw = jax.block_until_ready(weighted_l1(x, t, None))
    assert jnp.allclose(loss_w, _reference(x, t, w), rtol=1e-5, atol=1e-6)
    assert jnp.allclose(loss_nw, _reference(x, t, None), rtol=1e-5, atol=1e-6)

    # bf16 inputs stay bf16 in HBM (half the DMA bytes); kernel upcasts in VMEM.
    xb, tb, wb = (a.astype(jnp.bfloat16) for a in (x, t, w))
    loss_b = jax.block_until_ready(weighted_l1(xb, tb, wb))
    assert jnp.allclose(loss_b, _reference(xb, tb, wb), rtol=1e-4, atol=1e-4)

    # Element count not a multiple of 128 -> epilogue tail + partial last block
    # (rows=29: one full 24-row block + one masked out-of-bounds block).
    x2 = jax.random.normal(ks[3], (2, 3, 37, 17), jnp.float32)
    t2 = jax.random.normal(ks[4], (2, 3, 37, 17), jnp.float32)
    w2 = jax.random.uniform(ks[5], (2, 3, 37, 17), jnp.float32)
    loss2 = jax.block_until_ready(weighted_l1(x2, t2, w2))
    assert jnp.allclose(loss2, _reference(x2, t2, w2), rtol=1e-5, atol=1e-5)

    # Multi-block accumulation with a masked partial last block (forced small
    # blocks so the sequential reduction loop is exercised at modest size).
    x3 = jax.random.normal(ks[6], (5, 4, 100, 128), jnp.float32)
    t3 = jax.random.normal(ks[7], (5, 4, 100, 128), jnp.float32)
    w3 = jax.random.uniform(ks[8], (5, 4, 100, 128), jnp.float32)
    loss3 = jax.block_until_ready(weighted_l1(x3, t3, w3, block_bytes=64 * 1024))
    assert jnp.allclose(loss3, _reference(x3, t3, w3), rtol=1e-4, atol=1e-5)
    loss3_big = jax.block_until_ready(weighted_l1(x3, t3, w3))
    assert jnp.allclose(loss3_big, _reference(x3, t3, w3), rtol=1e-4, atol=1e-5)

    print("KERNEL_OK")
</pallas_src>

<mosaic_0001>
module attributes {stable_mosaic.version = 11 : i64} {
  func.func @kernel(%arg0: i32, %arg1: memref<16x128xf32, #tpu.memory_space<vmem>>, %arg2: memref<16x128xf32, #tpu.memory_space<vmem>>, %arg3: memref<16x128xf32, #tpu.memory_space<vmem>>, %arg4: memref<8x128xf32, #tpu.memory_space<vmem>>) attributes {dimension_semantics = [#tpu.dimension_semantics<arbitrary>], iteration_bounds = array<i64: 1>, scalar_prefetch = 0 : i64, scratch_operands = 0 : i64, tpu.core_type = #tpu.core_type<tc>, window_params = [{transform_indices = @transform_0, window_bounds = array<i64: 16, 128>}, {transform_indices = @transform_1, window_bounds = array<i64: 16, 128>}, {transform_indices = @transform_2, window_bounds = array<i64: 16, 128>}, {pipeline_mode = #tpu.pipeline_mode<synchronous>, transform_indices = @transform_3, window_bounds = array<i64: 8, 128>}]} {
    %c0_i32 = arith.constant 0 : i32
    %0 = arith.cmpi eq, %arg0, %c0_i32 : i32
    %1 = arith.extui %0 : i1 to i32
    %c0_i32_0 = arith.constant 0 : i32
    %2 = arith.cmpi ne, %1, %c0_i32_0 : i32
    scf.if %2 {
      %cst_10 = arith.constant 0.000000e+00 : f32
      %14 = vector.broadcast %cst_10 : f32 to vector<8x128xf32>
      %c0_11 = arith.constant 0 : index
      %c0_12 = arith.constant 0 : index
      %15 = vector.load %arg4[%c0_11, %c0_12] : memref<8x128xf32, #tpu.memory_space<vmem>>, vector<8x128xf32>
      tpu.vector_store %arg4[%c0_11, %c0_12], %14 {strides = array<i32>} : memref<8x128xf32, #tpu.memory_space<vmem>>, vector<8x128xf32>,
    } else {
    }
    %c0 = arith.constant 0 : index
    %c0_1 = arith.constant 0 : index
    %3 = vector.load %arg1[%c0, %c0_1] : memref<16x128xf32, #tpu.memory_space<vmem>>, vector<16x128xf32>
    %c0_2 = arith.constant 0 : index
    %c0_3 = arith.constant 0 : index
    %4 = vector.load %arg2[%c0_2, %c0_3] : memref<16x128xf32, #tpu.memory_space<vmem>>, vector<16x128xf32>
    %5 = arith.subf %3, %4 : vector<16x128xf32>
    %6 = math.absf %5 : vector<16x128xf32>
    %c0_4 = arith.constant 0 : index
    %c0_5 = arith.constant 0 : index
    %7 = vector.load %arg3[%c0_4, %c0_5] : memref<16x128xf32, #tpu.memory_space<vmem>>, vector<16x128xf32>
    %8 = arith.mulf %7, %6 : vector<16x128xf32>
    %c0_6 = arith.constant 0 : index
    %c0_7 = arith.constant 0 : index
    %9 = vector.load %arg4[%c0_6, %c0_7] : memref<8x128xf32, #tpu.memory_space<vmem>>, vector<8x128xf32>
    %10 = vector.shape_cast %8 : vector<16x128xf32> to vector<2x8x128xf32>
    %cst = arith.constant dense<0.000000e+00> : vector<8x128xf32>
    %11 = vector.multi_reduction <add>, %10, %cst [0] : vector<2x8x128xf32> to vector<8x128xf32>
    %12 = arith.addf %9, %11 : vector<8x128xf32>
    %c0_8 = arith.constant 0 : index
    %c0_9 = arith.constant 0 : index
    %13 = vector.load %arg4[%c0_8, %c0_9] : memref<8x128xf32, #tpu.memory_space<vmem>>, vector<8x128xf32>
    tpu.vector_store %arg4[%c0_8, %c0_9], %12 {strides = array<i32>} : memref<8x128xf32, #tpu.memory_space<vmem>>, vector<8x128xf32>,
    return
  }
  func.func @transform_0(%arg0: i32) -> (i32, i32) {
    %c0_i32 = arith.constant 0 : i32
    %c0_i32_0 = arith.constant 0 : i32
    return %arg0, %c0_i32 : i32, i32
  }
  func.func @transform_1(%arg0: i32) -> (i32, i32) {
    %c0_i32 = arith.constant 0 : i32
    %c0_i32_0 = arith.constant 0 : i32
    return %arg0, %c0_i32 : i32, i32
  }
  func.func @transform_2(%arg0: i32) -> (i32, i32) {
    %c0_i32 = arith.constant 0 : i32
    %c0_i32_0 = arith.constant 0 : i32
    return %arg0, %c0_i32 : i32, i32
  }
  func.func @transform_3(%arg0: i32) -> (i32, i32) {
    %c0_i32 = arith.constant 0 : i32
    %c0_i32_0 = arith.constant 0 : i32
    %c0_i32_1 = arith.constant 0 : i32
    return %c0_i32, %c0_i32_0 : i32, i32
  }
}

</mosaic_0001>

<llo_original>
// kernel: tpu_custom_call.1
$region0: #{tpu_custom_call.1}
  #allocation0 [shape = 'u32[]', space=smem, size = 0x4, offset = 0x4, fixed_abs, tag = 'smem constant byte address 0x4 - core index']
  #allocation1 [shape = 'u32[144,128]{1,0:T(1,128)}', space=vmem, size = 0x12000, scoped, tag = 'internal scratch']
  %s0 = inlined_call_operand.hbm [shape: f32[16,128], index: 0, kind: input, shape index: {}]
  %s1 = inlined_call_operand.hbm [shape: f32[16,128], index: 1, kind: input, shape index: {}]
  %s2 = inlined_call_operand.hbm [shape: f32[16,128], index: 2, kind: input, shape index: {}]
  %s3 = inlined_call_operand.hbm [shape: f32[8,128], index: 3, kind: output, shape index: {}]
  %s4 = sld [smem:[#allocation0]]
  $region38: #{tpu_custom_call.1} parent=0
    _
  %s6 = ssub.s32 1, %s4
  %s7 = scalar_select 0, %s6, %s4
  $region1: #{tpu_custom_call.1} parent=0
    #allocation2 [shape = 'u8[8192]{0}', space=vmem, size = 0x2000, scoped, tag = 'input window, operand 0, single buffered']
    #allocation3 [shape = 's32[1]{0}', space=sflag, size = 0x4, scoped, tag = 'scoped memory for tpu_custom_call.1']
    #allocation4 [shape = 's32[1]{0}', space=sflag, size = 0x4, scoped, tag = 'scoped memory for tpu_custom_call.1']
    #allocation5 [shape = 'u8[8192]{0}', space=vmem, size = 0x2000, scoped, tag = 'input window, operand 1, single buffered']
    #allocation6 [shape = 's32[1]{0}', space=sflag, size = 0x4, scoped, tag = 'scoped memory for tpu_custom_call.1']
    #allocation7 [shape = 'u8[8192]{0}', space=vmem, size = 0x2000, scoped, tag = 'input window, operand 2, single buffered']
    #allocation8 [shape = 'u8[4096]{0}', space=vmem, size = 0x1000, scoped, tag = 'output window, operand 0, single buffered']
    %8 = vsyncpa [#allocation3], 0
    %9 = vsyncpa [#allocation6], 0
    %10 = vsyncpa [#allocation4], 0
    // Predicated region
    $region2: #{tpu_custom_call.1} parent=1 // pred_check
      _
    $region3: #{tpu_custom_call.1} parent=1 // pred_check_branch
      %12 = sbr.rel (0) target = $region5
    $region4: #{tpu_custom_call.1} parent=1 // pred_region
      %s14 = ssub.s32 256, 256
      %15 = vsyncadd [#allocation3], %s14
      %s16 = sshll.u32 [#allocation2], 4
      %s17 = int_to_ptr.vmem [resolvable:$true] %s16
      %22 = dma.hbm_to_vmem [thread:$0]  %s0, 256, %s17, [#allocation3], 128, 128, 8
    $region5: #{tpu_custom_call.1} parent=1 // pred_fallthru
      _
    // Predicated region
    $region6: #{tpu_custom_call.1} parent=1 // pred_check
      _
    $region7: #{tpu_custom_call.1} parent=1 // pred_check_branch
      %24 = sbr.rel (0) target = $region9
    $region8: #{tpu_custom_call.1} parent=1 // pred_region
      %s26 = ssub.s32 256, 256
      %27 = vsyncadd [#allocation6], %s26
      %s28 = sshll.u32 [#allocation5], 4
      %s29 = int_to_ptr.vmem [resolvable:$true] %s28
      %34 = dma.hbm_to_vmem [thread:$0]  %s1, 256, %s29, [#allocation6], 128, 128, 8
    $region9: #{tpu_custom_call.1} parent=1 // pred_fallthru
      _
    // Predicated region
    $region10: #{tpu_custom_call.1} parent=1 // pred_check
      _
    $region11: #{tpu_custom_call.1} parent=1 // pred_check_branch
      %36 = sbr.rel (0) target = $region13
    $region12: #{tpu_custom_call.1} parent=1 // pred_region
      %s38 = ssub.s32 256, 256
      %39 = vsyncadd [#allocation6], %s38
      %s40 = sshll.u32 [#allocation7], 4
      %s41 = int_to_ptr.vmem [resolvable:$true] %s40
      %46 = dma.hbm_to_vmem [thread:$0]  %s2, 256, %s41, [#allocation6], 128, 128, 8
    $region13: #{tpu_custom_call.1} parent=1 // pred_fallthru
      _
    // Predicated region
    $region14: #{tpu_custom_call.1} parent=1 // pred_check
      _
    $region15: #{tpu_custom_call.1} parent=1 // pred_check_branch
      %48 = sbr.rel (0) target = $region17
    $region16: #{tpu_custom_call.1} parent=1 // pred_region
      %49 = dma.done [#allocation3], 256
    $region17: #{tpu_custom_call.1} parent=1 // pred_fallthru
      _
    // Predicated region
    $region18: #{tpu_custom_call.1} parent=1 // pred_check
      _
    $region19: #{tpu_custom_call.1} parent=1 // pred_check_branch
      %51 = sbr.rel (0) target = $region21
    $region20: #{tpu_custom_call.1} parent=1 // pred_region
      %52 = dma.done [#allocation6], 256
    $region21: #{tpu_custom_call.1} parent=1 // pred_fallthru
      _
    // Predicated region
    $region22: #{tpu_custom_call.1} parent=1 // pred_check
      _
    $region23: #{tpu_custom_call.1} parent=1 // pred_check_branch
      %54 = sbr.rel (0) target = $region25
    $region24: #{tpu_custom_call.1} parent=1 // pred_region
      %55 = dma.done [#allocation6], 256
    $region25: #{tpu_custom_call.1} parent=1 // pred_fallthru
      _
    %p56 = scmp.eq.s32.totalorder 0, 0
    // Predicated region
    $region26: #{tpu_custom_call.1} parent=1 // pred_check
      %p57 = pneg %p56
    $region27: #{tpu_custom_call.1} parent=1 // pred_check_branch
      %59 = sbr.rel (%p57) target = $region29
    $region28: #{tpu_custom_call.1} parent=1 // pred_region
      %60 = vst [vmem:[#allocation8] sm:$0xff] 0.0
    $region29: #{tpu_custom_call.1} parent=1 // pred_fallthru
      _
    %v61 = vld [vmem:[#allocation2] sm:$0xff]
    %v62 = vld [vmem:[#allocation2 + $0x8] sm:$0xff]
    %v63 = vld [vmem:[#allocation5] sm:$0xff]
    %v64 = vld [vmem:[#allocation5 + $0x8] sm:$0xff]
    %v65 = vsub.f32 %v61, %v63
    %v66 = vsub.f32 %v62, %v64
    %v67 = vand.u32 2147483647, %v65
    %v68 = vand.u32 2147483647, %v66
    %v69 = vld [vmem:[#allocation7] sm:$0xff]
    %v70 = vld [vmem:[#allocation7 + $0x8] sm:$0xff]
    %v71 = vmul.f32 %v69, %v67
    %v72 = vmul.f32 %v70, %v68
    %v73 = vld [vmem:[#allocation8] sm:$0xff]
    %v74 = vadd.f32 %v71, %v72
    %v75 = vadd.f32 %v73, %v74
    %76 = vst [vmem:[#allocation8] sm:$0xff] %v75
    // Predicated region
    $region30: #{tpu_custom_call.1} parent=1 // pred_check
      _
    $region31: #{tpu_custom_call.1} parent=1 // pred_check_branch
      %78 = sbr.rel (0) target = $region33
    $region32: #{tpu_custom_call.1} parent=1 // pred_region
      %s80 = ssub.s32 128, 128
      %81 = vsyncadd [#allocation4], %s80
      %s83 = sshll.u32 [#allocation8], 4
      %s84 = int_to_ptr.vmem [resolvable:$true] %s83
      %86 = dma.vmem_to_hbm [thread:$0]  %s84, 128, %s3, [#allocation4]
    $region33: #{tpu_custom_call.1} parent=1 // pred_fallthru
      _
    // Predicated region
    $region34: #{tpu_custom_call.1} parent=1 // pred_check
      _
    $region35: #{tpu_custom_call.1} parent=1 // pred_check_branch
      %88 = sbr.rel (0) target = $region37
    $region36: #{tpu_custom_call.1} parent=1 // pred_region
      %89 = dma.done [#allocation4], 128
    $region37: #{tpu_custom_call.1} parent=1 // pred_fallthru
      _
    %90 = vsyncpa [#allocation3], 1
    %91 = vsyncpa [#allocation6], 1
    %92 = vsyncpa [#allocation4], 1

</llo_original>
